<compile_context>
chip_gen: v7x
topology: tpu7x:2x2x1
jax: 0.10.0
libtpu: 0.0.40
codegen_flags: <defaults>
</compile_context>

<pallas_src>
import jax
import jax.numpy as jnp
from jax.experimental import pallas as pl
from jax.experimental.pallas import tpu as pltpu


def _edge_dot_kernel(u_ref, v_ref, o_ref):
    # u_ref, v_ref: (D, TILE_E) transposed tiles of gathered src/dst features,
    #               edges on the lane axis.
    # o_ref:        (1, TILE_E) lane-dense per-edge dot products.
    prod = (u_ref[...] * v_ref[...]).astype(jnp.float32)  # f32 accumulation
    o_ref[...] = jnp.sum(prod, axis=0, keepdims=True).astype(o_ref.dtype)


def graph_dot_product_decoder(h, src, dst, *, tile_e=1024, vmem_limit_bytes=None):
    """Per-edge dot products h[src[e]] . h[dst[e]] -> (E, 1)."""
    N, D = h.shape
    E = src.shape[0]
    itemsize = jnp.dtype(h.dtype).itemsize

    # Tile size: multiple of 128 (lane width); shrink for tiny edge counts so
    # we do not gather far more rows than needed.
    lane = 128
    tile_e = max(lane, min(int(tile_e), pl.cdiv(E, lane) * lane))
    E_pad = pl.cdiv(E, tile_e) * tile_e

    # Pad only the cheap int32 index vectors (with node 0, a valid index); the
    # gathered feature slabs then come out already tile-aligned. Padded edges
    # produce h[0].h[0] and are sliced off at the end.
    if E_pad != E:
        pad = E_pad - E
        src = jnp.pad(src, (0, pad))
        dst = jnp.pad(dst, (0, pad))

    # Gather endpoint features in feature-major (transposed) layout so edges
    # land on the lane axis inside the kernel.
    hT = h.T                      # (D, N)  -- small vs. the (E, D) gathers
    uT = hT[:, src]               # (D, E_pad)
    vT = hT[:, dst]               # (D, E_pad)

    grid = (E_pad // tile_e,)

    cost = pl.CostEstimate(
        flops=2 * E_pad * D,
        transcendentals=0,
        bytes_accessed=(2 * E_pad * D + E_pad) * itemsize,
    )

    out = pl.pallas_call(
        _edge_dot_kernel,
        out_shape=jax.ShapeDtypeStruct((1, E_pad), h.dtype),
        grid_spec=pltpu.PrefetchScalarGridSpec(
            num_scalar_prefetch=0,
            grid=grid,
            in_specs=[
                pl.BlockSpec((D, tile_e), lambda i: (0, i)),
                pl.BlockSpec((D, tile_e), lambda i: (0, i)),
            ],
            out_specs=pl.BlockSpec((1, tile_e), lambda i: (0, i)),
        ),
        compiler_params=pltpu.CompilerParams(
            # Edge tiles are independent -> shard across TensorCores (v7x has 2).
            dimension_semantics=("parallel",),
            vmem_limit_bytes=vmem_limit_bytes,
        ),
        cost_estimate=cost,
    )(uT, vT)

    # (1, E_pad) -> (E, 1); pure layout plumbing outside the kernel.
    return out.reshape(E_pad, 1)[:E]


if __name__ == "__main__":
    key = jax.random.PRNGKey(0)
    k_h, k_src, k_dst = jax.random.split(key, 3)

    N = 16   # number of nodes
    D = 32   # hidden dim
    E = 24   # number of edges

    h = jax.random.normal(k_h, (N, D), dtype=jnp.float32)
    src = jax.random.randint(k_src, (E,), 0, N, dtype=jnp.int32)
    dst = jax.random.randint(k_dst, (E,), 0, N, dtype=jnp.int32)

    decoder = jax.jit(lambda h, s, d: graph_dot_product_decoder(h, s, d))
    out = decoder(h, src, dst)
    out = jax.block_until_ready(out)

    # Reference check (pure JAX, mirrors DGL u_dot_v).
    ref = jnp.sum(h[src] * h[dst], axis=-1, keepdims=True)
    assert out.shape == (E, 1), out.shape
    assert jnp.allclose(out, ref, atol=1e-5, rtol=1e-5), float(jnp.max(jnp.abs(out - ref)))

    print("KERNEL_OK")
</pallas_src>

<mosaic_0001>
module attributes {stable_mosaic.version = 11 : i64} {
  func.func @_edge_dot_kernel(%arg0: i32, %arg1: memref<32x128xf32, #tpu.memory_space<vmem>>, %arg2: memref<32x128xf32, #tpu.memory_space<vmem>>, %arg3: memref<1x128xf32, #tpu.memory_space<vmem>>) attributes {dimension_semantics = [#tpu.dimension_semantics<parallel>], iteration_bounds = array<i64: 1>, scalar_prefetch = 0 : i64, scratch_operands = 0 : i64, tpu.core_type = #tpu.core_type<tc>, window_params = [{transform_indices = @transform_0, window_bounds = array<i64: 32, 128>}, {transform_indices = @transform_1, window_bounds = array<i64: 32, 128>}, {transform_indices = @transform_2, window_bounds = array<i64: 1, 128>}]} {
    %c0 = arith.constant 0 : index
    %c0_0 = arith.constant 0 : index
    %0 = vector.load %arg1[%c0, %c0_0] : memref<32x128xf32, #tpu.memory_space<vmem>>, vector<32x128xf32>
    %c0_1 = arith.constant 0 : index
    %c0_2 = arith.constant 0 : index
    %1 = vector.load %arg2[%c0_1, %c0_2] : memref<32x128xf32, #tpu.memory_space<vmem>>, vector<32x128xf32>
    %2 = arith.mulf %0, %1 : vector<32x128xf32>
    %cst = arith.constant dense<0.000000e+00> : vector<128xf32>
    %3 = vector.multi_reduction <add>, %2, %cst [0] : vector<32x128xf32> to vector<128xf32>
    %4 = vector.shape_cast %3 : vector<128xf32> to vector<1x128xf32>
    %c0_3 = arith.constant 0 : index
    %c0_4 = arith.constant 0 : index
    %5 = vector.load %arg3[%c0_3, %c0_4] : memref<1x128xf32, #tpu.memory_space<vmem>>, vector<1x128xf32>
    tpu.vector_store %arg3[%c0_3, %c0_4], %4 {strides = array<i32>} : memref<1x128xf32, #tpu.memory_space<vmem>>, vector<1x128xf32>,
    return
  }
  func.func @transform_0(%arg0: i32) -> (i32, i32) {
    %c0_i32 = arith.constant 0 : i32
    %c0_i32_0 = arith.constant 0 : i32
    return %c0_i32, %arg0 : i32, i32
  }
  func.func @transform_1(%arg0: i32) -> (i32, i32) {
    %c0_i32 = arith.constant 0 : i32
    %c0_i32_0 = arith.constant 0 : i32
    return %c0_i32, %arg0 : i32, i32
  }
  func.func @transform_2(%arg0: i32) -> (i32, i32) {
    %c0_i32 = arith.constant 0 : i32
    %c0_i32_0 = arith.constant 0 : i32
    return %c0_i32, %arg0 : i32, i32
  }
}

</mosaic_0001>

<llo_original>
// kernel: _lambda_.1
$region0: #{_lambda_.1}
  #allocation0 [shape = 'u32[]', space=smem, size = 0x4, offset = 0x4, fixed_abs, tag = 'smem constant byte address 0x4 - core index']
  #allocation1 [shape = 'u32[144,128]{1,0:T(1,128)}', space=vmem, size = 0x12000, scoped, tag = 'internal scratch']
  %s0 = inlined_call_operand.vmem [shape: f32[32,128], index: 0, kind: input, shape index: {}]
  %s1 = inlined_call_operand.vmem [shape: f32[32,128], index: 1, kind: input, shape index: {}]
  %s2 = inlined_call_operand.vmem [shape: f32[1,128], index: 2, kind: output, shape index: {}]
  %s3 = sld [smem:[#allocation0]]
  $region18: #{_lambda_.1} parent=0
    _
  %s5 = ssub.s32 1, %s3
  %s6 = scalar_select 0, %s5, %s3
  // Predicated region
  $region2: #{_lambda_.1} parent=0 // pred_check
    _
  $region3: #{_lambda_.1} parent=0 // pred_check_branch
    %8 = sbr.rel (0) target = $region5
  $region4: #{_lambda_.1} parent=0 // pred_region
    _
  $region5: #{_lambda_.1} parent=0 // pred_fallthru
    _
  // Predicated region
  $region6: #{_lambda_.1} parent=0 // pred_check
    _
  $region7: #{_lambda_.1} parent=0 // pred_check_branch
    %10 = sbr.rel (0) target = $region9
  $region8: #{_lambda_.1} parent=0 // pred_region
    _
  $region9: #{_lambda_.1} parent=0 // pred_fallthru
    _
  %v11 = vld [vmem:[%s0] sm:$0xff]
  %v12 = vld [vmem:[%s0 + $0x8] sm:$0xff]
  %v13 = vld [vmem:[%s0 + $0x10] sm:$0xff]
  %v14 = vld [vmem:[%s0 + $0x18] sm:$0xff]
  %v15 = vld [vmem:[%s1] sm:$0xff]
  %v16 = vld [vmem:[%s1 + $0x8] sm:$0xff]
  %v17 = vld [vmem:[%s1 + $0x10] sm:$0xff]
  %v18 = vld [vmem:[%s1 + $0x18] sm:$0xff]
  %v19 = vmul.f32 %v11, %v15
  %v20 = vmul.f32 %v12, %v16
  %v21 = vmul.f32 %v13, %v17
  %v22 = vmul.f32 %v14, %v18
  %v23 = vadd.f32 %v19, %v20
  %v24 = vadd.f32 %v23, %v21
  %v25 = vadd.f32 %v24, %v22
  %v26 = vrot.slane %v25, 4
  %v27 = vadd.f32 %v25, %v26
  %v28 = vrot.slane %v27, 2
  %v29 = vadd.f32 %v27, %v28
  %v30 = vrot.slane %v29, 1
  %v31 = vadd.f32 %v29, %v30
  %32 = vst [vmem:[%s2] sm:$0x1] %v31
  // Predicated region
  $region10: #{_lambda_.1} parent=0 // pred_check
    _
  $region11: #{_lambda_.1} parent=0 // pred_check_branch
    %34 = sbr.rel (0) target = $region13
  $region12: #{_lambda_.1} parent=0 // pred_region
    _
  $region13: #{_lambda_.1} parent=0 // pred_fallthru
    _
  // Predicated region
  $region14: #{_lambda_.1} parent=0 // pred_check
    _
  $region15: #{_lambda_.1} parent=0 // pred_check_branch
    %36 = sbr.rel (0) target = $region17
  $region16: #{_lambda_.1} parent=0 // pred_region
    _
  $region17: #{_lambda_.1} parent=0 // pred_fallthru
    _

</llo_original>
